<compile_context>
chip_gen: v5e
topology: v5e:2x2
jax: 0.10.0
libtpu: 0.0.40
codegen_flags: <defaults>
</compile_context>

<pallas_src>
import jax
import jax.numpy as jnp
from jax.experimental import pallas as pl
from jax.experimental.pallas import tpu as pltpu

_LANE = 128
_MAX_LANES = 4096                    # widest lane-dense last dim we try
_TARGET_TILE_BYTES = 2 * 1024 * 1024  # ~2 MiB per tile (roofline plateau)


def _copy_kernel(x_ref, o_ref):
    # Pure identity copy of the current tile (the "compute" of a view).
    o_ref[...] = x_ref[...]


def _resolve_view_shape(total, shape):
    """Resolve a torch-style view shape (supports a single -1)."""
    shape = list(shape)
    if shape.count(-1) > 1:
        raise ValueError("only one -1 allowed in view shape")
    if -1 in shape:
        known = 1
        for s in shape:
            if s != -1:
                known *= s
        if total % known != 0:
            raise ValueError(f"cannot view {total} elements as {shape}")
        shape[shape.index(-1)] = total // known
    prod = 1
    for s in shape:
        prod *= s
    if prod != total:
        raise ValueError(f"view shape {shape} incompatible with {total} elements")
    return tuple(shape)


def _sublane_min(dtype):
    # Packed-sublane minimum: 8 for 32-bit, 16 for bf16/fp16, 32 for int8/fp8.
    return max(8, 32 // jnp.dtype(dtype).itemsize)


def _pick_slab(total, itemsize, sub_min):
    """Padding-free (rows, lanes, block_rows) factorization, or None."""
    if total % _LANE != 0:
        return None
    m = total // _LANE
    # Widest lane-dense last dim (multiple of 128, <= _MAX_LANES) dividing total.
    d = 1
    for cand in range(min(_MAX_LANES // _LANE, m), 0, -1):
        if m % cand == 0:
            d = cand
            break
    lanes = _LANE * d
    rows = m // d
    # Rows per block: aim at ~2 MiB tiles, multiple of the dtype sublane minimum.
    br = _TARGET_TILE_BYTES // (lanes * itemsize)
    br = max(sub_min, (br // sub_min) * sub_min)
    if br >= rows:
        br = rows  # full extent along rows is always a legal block dim
    return rows, lanes, br


def pallas_view(x, shape):
    """Equivalent of torch.Tensor.view(*shape) with the copy done in Pallas."""
    total = x.size
    out_shape = _resolve_view_shape(total, shape)
    dtype = x.dtype
    itemsize = jnp.dtype(dtype).itemsize

    # Contiguous row-major flatten (metadata only, no HBM copy in XLA).
    flat = x.reshape(-1)

    plan = _pick_slab(total, itemsize, _sublane_min(dtype))
    if plan is None:
        # Total not a multiple of 128 lanes: single full-extent block
        # (no grid, whole buffer in VMEM).  Fine for small/odd sizes.
        # TODO(synk): very large non-128-divisible buffers would need a ragged
        # tiled path; not needed for this module's usage.
        slab = flat.reshape(1, total)
        copied = pl.pallas_call(
            _copy_kernel,
            out_shape=jax.ShapeDtypeStruct((1, total), dtype),
        )(slab)
        return copied.reshape(out_shape)

    rows, lanes, block_rows = plan
    slab = flat.reshape(rows, lanes)  # metadata reshape, no copy
    grid = (pl.cdiv(rows, block_rows),)

    copied = pl.pallas_call(
        _copy_kernel,
        out_shape=jax.ShapeDtypeStruct((rows, lanes), dtype),
        grid_spec=pltpu.PrefetchScalarGridSpec(
            num_scalar_prefetch=0,
            grid=grid,
            in_specs=[pl.BlockSpec((block_rows, lanes), lambda i: (i, 0))],
            out_specs=pl.BlockSpec((block_rows, lanes), lambda i: (i, 0)),
        ),
        compiler_params=pltpu.CompilerParams(
            # Single grid axis is fully independent -> shards across the two
            # TensorCores on v7x; harmless (serial loop) on v5e/v6e.
            dimension_semantics=("parallel",),
        ),
    )(slab)

    # Metadata-only reshape to the target view shape (== torch .view).
    return copied.reshape(out_shape)


class View:
    """JAX/Pallas port of the PyTorch View module."""

    def __init__(self, shape):
        self.shape = shape

    def __call__(self, x):
        return pallas_view(x, self.shape)


if __name__ == "__main__":
    key = jax.random.PRNGKey(0)

    # Input consistent with the module's typical usage in a dynamics predictor:
    # NCHW feature map flattened per-batch.
    x = jax.random.normal(key, (2, 4, 16, 16), dtype=jnp.float32)
    view = View(shape=(2, -1))          # -> (2, 4*16*16) = (2, 1024)
    out = jax.block_until_ready(view(x))
    ref = x.reshape(2, -1)
    assert out.shape == (2, 1024), out.shape
    assert out.dtype == x.dtype
    assert bool(jnp.array_equal(out, ref)), "view output mismatch (f32)"

    # bf16 path: exercises the dtype-aware (>=16 sublane) tiling.
    xb = jax.random.normal(key, (2, 8, 32, 32), dtype=jnp.bfloat16)
    outb = jax.block_until_ready(View((-1, 32 * 32))(xb))
    assert bool(jnp.array_equal(outb, xb.reshape(-1, 32 * 32))), "view mismatch (bf16)"

    # Odd total (not a multiple of 128): full-extent fallback path.
    xo = jax.random.normal(key, (3, 5, 7), dtype=jnp.float32)
    outo = jax.block_until_ready(View((5, 21))(xo))
    assert bool(jnp.array_equal(outo, xo.reshape(5, 21))), "view mismatch (odd)"

    print("KERNEL_OK")
</pallas_src>

<mosaic_0001>
module attributes {stable_mosaic.version = 11 : i64} {
  func.func @_copy_kernel(%arg0: i32, %arg1: memref<1x2048xf32, #tpu.memory_space<vmem>>, %arg2: memref<1x2048xf32, #tpu.memory_space<vmem>>) attributes {dimension_semantics = [#tpu.dimension_semantics<parallel>], iteration_bounds = array<i64: 1>, scalar_prefetch = 0 : i64, scratch_operands = 0 : i64, tpu.core_type = #tpu.core_type<tc>, window_params = [{transform_indices = @transform_0, window_bounds = array<i64: 1, 2048>}, {transform_indices = @transform_1, window_bounds = array<i64: 1, 2048>}]} {
    %c0 = arith.constant 0 : index
    %c0_0 = arith.constant 0 : index
    %0 = vector.load %arg1[%c0, %c0_0] : memref<1x2048xf32, #tpu.memory_space<vmem>>, vector<1x2048xf32>
    %c0_1 = arith.constant 0 : index
    %c0_2 = arith.constant 0 : index
    %1 = vector.load %arg2[%c0_1, %c0_2] : memref<1x2048xf32, #tpu.memory_space<vmem>>, vector<1x2048xf32>
    tpu.vector_store %arg2[%c0_1, %c0_2], %0 {strides = array<i32>} : memref<1x2048xf32, #tpu.memory_space<vmem>>, vector<1x2048xf32>,
    return
  }
  func.func @transform_0(%arg0: i32) -> (i32, i32) {
    %c0_i32 = arith.constant 0 : i32
    %c0_i32_0 = arith.constant 0 : i32
    return %arg0, %c0_i32 : i32, i32
  }
  func.func @transform_1(%arg0: i32) -> (i32, i32) {
    %c0_i32 = arith.constant 0 : i32
    %c0_i32_0 = arith.constant 0 : i32
    return %arg0, %c0_i32 : i32, i32
  }
}

</mosaic_0001>

<llo_original>
// kernel: tpu_custom_call.1
$region0: #{tpu_custom_call.1}
  #allocation0 [shape = 'u32[]', space=smem, size = 0x4, offset = 0x4, fixed_abs, tag = 'smem constant byte address 0x4 - core index']
  #allocation1 [shape = 'u32[72,128]{1,0:T(1,128)}', space=vmem, size = 0x9000, scoped, tag = 'internal scratch']
  %s0 = inlined_call_operand.hbm [shape: f32[1,2048], index: 0, kind: input, shape index: {}]
  %s1 = inlined_call_operand.hbm [shape: f32[1,2048], index: 1, kind: output, shape index: {}]
  %s2 = sld [smem:[#allocation0]]
  $region18: #{tpu_custom_call.1} parent=0
    _
  %s4 = ssub.s32 1, %s2
  %s5 = scalar_select 0, %s4, %s2
  $region1: #{tpu_custom_call.1} parent=0
    #allocation2 [shape = 'u8[8192]{0}', space=vmem, size = 0x2000, scoped, tag = 'input window, operand 0, single buffered']
    #allocation3 [shape = 's32[1]{0}', space=sflag, size = 0x4, scoped, tag = 'scoped memory for tpu_custom_call.1']
    #allocation4 [shape = 's32[1]{0}', space=sflag, size = 0x4, scoped, tag = 'scoped memory for tpu_custom_call.1']
    #allocation5 [shape = 'u8[8192]{0}', space=vmem, size = 0x2000, scoped, tag = 'output window, operand 0, single buffered']
    %6 = vsyncpa [#allocation3], 0
    %7 = vsyncpa [#allocation4], 0
    // Predicated region
    $region2: #{tpu_custom_call.1} parent=1 // pred_check
      _
    $region3: #{tpu_custom_call.1} parent=1 // pred_check_branch
      %9 = sbr.rel (0) target = $region5
    $region4: #{tpu_custom_call.1} parent=1 // pred_region
      %11 = vsyncadd [#allocation3], 0
      %s13 = sshll.u32 %s0, 4
      %s14 = int_to_ptr.hbm [resolvable:$true] %s13
      %s15 = sshll.u32 [#allocation2], 4
      %s16 = int_to_ptr.vmem [resolvable:$true] %s15
      %18 = dma.hbm_to_vmem [thread:$0]  %s14, 256, %s16, [#allocation3]
    $region5: #{tpu_custom_call.1} parent=1 // pred_fallthru
      _
    // Predicated region
    $region6: #{tpu_custom_call.1} parent=1 // pred_check
      _
    $region7: #{tpu_custom_call.1} parent=1 // pred_check_branch
      %20 = sbr.rel (0) target = $region9
    $region8: #{tpu_custom_call.1} parent=1 // pred_region
      %22 = dma.done [#allocation3], 256
    $region9: #{tpu_custom_call.1} parent=1 // pred_fallthru
      _
    %v23 = vld [vmem:[#allocation2] sm:$0xff]
    %v24 = vld [vmem:[#allocation2 + $0x8] sm:$0xff]
    %25 = vst [vmem:[#allocation5] sm:$0xff] %v23
    %26 = vst [vmem:[#allocation5 + $0x8] sm:$0xff] %v24
    // Predicated region
    $region10: #{tpu_custom_call.1} parent=1 // pred_check
      _
    $region11: #{tpu_custom_call.1} parent=1 // pred_check_branch
      %28 = sbr.rel (0) target = $region13
    $region12: #{tpu_custom_call.1} parent=1 // pred_region
      %30 = vsyncadd [#allocation4], 0
      %s32 = sshll.u32 [#allocation5], 4
      %s33 = int_to_ptr.vmem [resolvable:$true] %s32
      %s34 = sshll.u32 %s1, 4
      %s35 = int_to_ptr.hbm [resolvable:$true] %s34
      %37 = dma.vmem_to_hbm [thread:$0]  %s33, 256, %s35, [#allocation4]
    $region13: #{tpu_custom_call.1} parent=1 // pred_fallthru
      _
    // Predicated region
    $region14: #{tpu_custom_call.1} parent=1 // pred_check
      _
    $region15: #{tpu_custom_call.1} parent=1 // pred_check_branch
      %39 = sbr.rel (0) target = $region17
    $region16: #{tpu_custom_call.1} parent=1 // pred_region
      %41 = dma.done [#allocation4], 256
    $region17: #{tpu_custom_call.1} parent=1 // pred_fallthru
      _
    %42 = vsyncpa [#allocation3], 1
    %43 = vsyncpa [#allocation4], 1

</llo_original>
